<compile_context>
chip_gen: v6e
topology: v6e:2x2x1
jax: 0.10.0
libtpu: 0.0.40
codegen_flags: <defaults>
</compile_context>

<pallas_src>
import functools
import math

import numpy as np

import jax
import jax.numpy as jnp
from jax import lax
from jax.experimental import pallas as pl
from jax.experimental.pallas import tpu as pltpu

_EPS = 1e-5
_INV_SQRT2 = 1.0 / math.sqrt(2.0)


def _gelu_exact(x):
    # PyTorch nn.GELU() default (approximate='none') -> erf-based GELU.
    return 0.5 * x * (1.0 + lax.erf(x * _INV_SQRT2))


def _lane_group_sum(row, group, n_groups):
    """Circular lane butterfly: every lane ends up holding the sum over the
    `n_groups` lanes that share its (lane % group) residue — i.e. the per-channel
    spatial sum in the lane-dense (col*C + c) layout.  Uses the XLU roll slot."""
    s = row
    shift = group
    for _ in range(int(math.log2(n_groups))):
        s = s + pltpu.roll(s, shift, axis=1)
        shift *= 2
    return s


def _decoder_kernel(x_ref, skip_ref, mupf_ref, p_ref, bup_ref, a_ref, b3_ref,
                    o_ref, *, c_out, w2):
    """One batch element per grid step.  All images are lane-dense slabs:

      x_ref    : (1, H,  W*Cin)                 low-res input image
      skip_ref : (1, 2H, 2W*Cskip)              skip connection
      mupf_ref : (W*Cin, 2*2W*Cout)             ConvT 2x2 weights, both ky fused on lanes
      p_ref    : (2H, 2H)                       0/1 row-interleave (up[2i+ky] = t[ky*H+i])
      bup_ref  : (1, 2W*Cout)                   ConvT bias, tiled over columns
      a_ref    : (3, 2W*(Cout+Cskip), 2W*Cout)  fused banded 3x3 conv weights, per ky
      b3_ref   : (1, 2W*Cout)                   conv bias, tiled over columns
      o_ref    : (1, 2H, 2W*Cout)               lane-dense output slab
    """
    h2 = o_ref.shape[1]
    wcu = bup_ref.shape[1]                    # up-branch lane width = 2W*Cout

    x = x_ref[0]                              # (H, W*Cin)     f32
    skip = skip_ref[0]                        # (2H, 2W*Cskip) f32

    # ---- ConvTranspose2d(k=2, s=2) -------------------------------------------
    # Dense channel/column mixing first (no zero rows hit the MXU), then a tiny
    # 0/1 matmul interleaves even/odd output rows.
    t_wide = jnp.dot(x, mupf_ref[...], preferred_element_type=jnp.float32)  # (H, 2*wcu)
    t = jnp.concatenate([t_wide[:, :wcu], t_wide[:, wcu:]], axis=0)         # (2H, wcu)
    up = jnp.dot(p_ref[...], t, preferred_element_type=jnp.float32) + bup_ref[...]

    # ---- Conv2d(3x3, pad=1) over concat([up, skip], channel) -----------------
    # Channel concat is a lane concat; dx taps + channel mixing are folded into the
    # banded a_ref matrices (K = 2W*(Cout+Cskip) fills the MXU); dy taps are zero-row
    # padding + static row slices.  Never materializes the NCHW concat.
    cat = jnp.concatenate([up, skip], axis=-1)                  # (2H, 2W*(Cout+Cskip))
    zrow = jnp.zeros((1, cat.shape[1]), jnp.float32)
    cat_p = jnp.concatenate([zrow, cat, zrow], axis=0)          # (2H+2, ...)

    acc = jnp.dot(cat_p[0:h2, :], a_ref[0], preferred_element_type=jnp.float32)
    acc = acc + jnp.dot(cat_p[1:h2 + 1, :], a_ref[1], preferred_element_type=jnp.float32)
    acc = acc + jnp.dot(cat_p[2:h2 + 2, :], a_ref[2], preferred_element_type=jnp.float32)
    acc = acc + b3_ref[...]

    # ---- InstanceNorm2d (biased variance, eps=1e-5, affine=False) + GELU -----
    inv_count = 1.0 / (h2 * w2)
    row_sum = jnp.sum(acc, axis=0, keepdims=True)               # (1, 2W*Cout)
    mean_row = _lane_group_sum(row_sum, c_out, w2) * inv_count
    cent = acc - mean_row
    sq_sum = jnp.sum(cent * cent, axis=0, keepdims=True)
    var_row = _lane_group_sum(sq_sum, c_out, w2) * inv_count
    y = cent * lax.rsqrt(var_row + _EPS)

    o_ref[0] = _gelu_exact(y).astype(o_ref.dtype)               # unmasked 128-lane store


def _build_operators(w_up, b_up, w_conv, b_conv, H, W):
    """One-time weight -> lane-dense-operator construction (hoisted out of the
    per-call path; the results are closed over by the jitted apply())."""
    f32 = np.float32
    w_up = np.asarray(w_up, f32)        # (Cin, Cout, 2, 2)
    b_up = np.asarray(b_up, f32)        # (Cout,)
    w_conv = np.asarray(w_conv, f32)    # (Co2, Cout+Cskip, 3, 3)
    b_conv = np.asarray(b_conv, f32)    # (Co2,)
    Cin, Cout = w_up.shape[:2]
    Co2 = w_conv.shape[0]
    Cskip = w_conv.shape[1] - Cout
    H2, W2 = 2 * H, 2 * W

    # ConvT channel/column operator, both kernel rows fused along lanes:
    #   mupf[j*Cin+ci, ky*(W2*Cout) + (2j+kx)*Cout + co] = w_up[ci, co, ky, kx]
    E = np.eye(W2, dtype=f32).reshape(W, 2, W2)                 # E[j, kx, 2j+kx] = 1
    mup = np.einsum('jxk,coyx->yjcko', E, w_up).reshape(2, W * Cin, W2 * Cout)
    mupf = np.concatenate([mup[0], mup[1]], axis=-1)            # (W*Cin, 2*W2*Cout)

    # Row interleave: up[2i+ky] = t[ky*H + i].
    P = np.zeros((H2, H2), f32)
    for i in range(H):
        P[2 * i, i] = 1.0
        P[2 * i + 1, H + i] = 1.0

    bup_row = np.tile(b_up, W2).reshape(1, W2 * Cout)

    # Banded 3x3 conv operators with dx taps + channel mixing folded in:
    #   a[ky, jin*C + c, jout*Co2 + o] = w[o, c, ky, kx],  jin = jout + kx - 1.
    # Up part and skip part are stacked along K to match the lane concat [up | skip].
    F = np.stack([np.eye(W2, k=1 - kx, dtype=f32) for kx in range(3)])       # (3, W2, W2)
    a_up = np.einsum('xpq,ocyx->ypcqo', F, w_conv[:, :Cout]).reshape(3, W2 * Cout, W2 * Co2)
    a_sk = np.einsum('xpq,ocyx->ypcqo', F, w_conv[:, Cout:]).reshape(3, W2 * Cskip, W2 * Co2)
    a_fused = np.concatenate([a_up, a_sk], axis=1)              # (3, W2*(Cout+Cskip), W2*Co2)

    b3_row = np.tile(b_conv, W2).reshape(1, W2 * Co2)

    return (jnp.asarray(mupf), jnp.asarray(P), jnp.asarray(bup_row),
            jnp.asarray(a_fused), jnp.asarray(b3_row))


def make_ginka_decoder(w_up, b_up, w_conv, b_conv, H, W):
    """Returns a jitted apply(x, skip) implementing GinkaDecoder (attention=False).

    x    : (N, Cin, H, W)
    skip : (N, Cskip, 2H, 2W)
    ->     (N, Cout, 2H, 2W)
    """
    Cin, Cout = w_up.shape[:2]
    Co2 = w_conv.shape[0]
    Cskip = w_conv.shape[1] - Cout
    H2, W2 = 2 * H, 2 * W
    assert Cskip > 0
    assert (W2 & (W2 - 1)) == 0, "lane butterfly needs power-of-two upsampled width"

    mupf, P, bup_row, a_fused, b3_row = _build_operators(w_up, b_up, w_conv, b_conv, H, W)
    kernel = functools.partial(_decoder_kernel, c_out=Co2, w2=W2)

    @jax.jit
    def apply(x, skip):
        N = x.shape[0]
        f32 = jnp.float32
        # NCHW -> lane-dense (rows, cols*channels) slabs (layout plumbing only).
        x_l = jnp.transpose(x, (0, 2, 3, 1)).reshape(N, H, W * Cin).astype(f32)
        skip_l = jnp.transpose(skip, (0, 2, 3, 1)).reshape(N, H2, W2 * Cskip).astype(f32)

        # NOTE: for much larger decoder stages the banded operators grow as (2W*C)^2;
        # there one would tile their output-lane axis with an extra grid dimension
        # (or raise vmem_limit_bytes) to stay inside v7x's 64 MiB VMEM.
        out_l = pl.pallas_call(
            kernel,
            out_shape=jax.ShapeDtypeStruct((N, H2, W2 * Co2), f32),
            grid=(N,),
            in_specs=[
                pl.BlockSpec((1, H, W * Cin), lambda n: (n, 0, 0)),
                pl.BlockSpec((1, H2, W2 * Cskip), lambda n: (n, 0, 0)),
                pl.BlockSpec((W * Cin, 2 * W2 * Cout), lambda n: (0, 0)),
                pl.BlockSpec((H2, H2), lambda n: (0, 0)),
                pl.BlockSpec((1, W2 * Cout), lambda n: (0, 0)),
                pl.BlockSpec((3, W2 * (Cout + Cskip), W2 * Co2), lambda n: (0, 0, 0)),
                pl.BlockSpec((1, W2 * Co2), lambda n: (0, 0)),
            ],
            out_specs=pl.BlockSpec((1, H2, W2 * Co2), lambda n: (n, 0, 0)),
            compiler_params=pltpu.CompilerParams(
                dimension_semantics=("parallel",)),
        )(x_l, skip_l, mupf, P, bup_row, a_fused, b3_row)

        # Lane-dense NHWC slab -> NCHW (consumers that accept the NHWC slab can skip this).
        return jnp.transpose(out_l.reshape(N, H2, W2, Co2), (0, 3, 1, 2))

    return apply


def _reference(x, skip, w_up, b_up, w_conv, b_conv):
    """Pure-JAX NCHW reference mirroring the PyTorch forward."""
    hp = lax.Precision.HIGHEST
    # ConvTranspose2d(k=2, s=2): out[n,o,2i+u,2j+v] = sum_c x[n,c,i,j]*w[c,o,u,v] + b[o]
    up6 = jnp.einsum('bcij,couv->boiujv', x, w_up, precision=hp)
    n, co, h, _, w, _ = up6.shape
    up = up6.reshape(n, co, 2 * h, 2 * w) + b_up.reshape(1, -1, 1, 1)
    cat = jnp.concatenate([up, skip], axis=1)
    y = lax.conv_general_dilated(
        cat, w_conv, window_strides=(1, 1), padding=((1, 1), (1, 1)),
        dimension_numbers=("NCHW", "OIHW", "NCHW"), precision=hp)
    y = y + b_conv.reshape(1, -1, 1, 1)
    mean = jnp.mean(y, axis=(2, 3), keepdims=True)
    var = jnp.mean((y - mean) ** 2, axis=(2, 3), keepdims=True)
    y = (y - mean) * lax.rsqrt(var + _EPS)
    return _gelu_exact(y)


if __name__ == "__main__":
    # Small decoder-stage shapes: in_channels=8, out_channels=8,
    # low-res input 8x8 -> upsampled / skip resolution 16x16 (so 2W*Cout = 128 lanes).
    N, Cin, Cout, H, W = 2, 8, 8, 8, 8

    key = jax.random.PRNGKey(0)
    kx, ks, kw1, kb1, kw2, kb2 = jax.random.split(key, 6)
    x = jax.random.normal(kx, (N, Cin, H, W), jnp.float32)
    skip = jax.random.normal(ks, (N, Cin, 2 * H, 2 * W), jnp.float32)
    w_up = jax.random.normal(kw1, (Cin, Cout, 2, 2), jnp.float32) * 0.2
    b_up = jax.random.normal(kb1, (Cout,), jnp.float32) * 0.1
    w_conv = jax.random.normal(kw2, (Cout, Cout + Cin, 3, 3), jnp.float32) * 0.1
    b_conv = jax.random.normal(kb2, (Cout,), jnp.float32) * 0.1

    # TODO(synk): CBAM / SEBlock (attention=True) branch not implemented; this kernel
    # covers the module's default attention=False path (InstanceNorm affine=False).
    decoder = make_ginka_decoder(w_up, b_up, w_conv, b_conv, H, W)   # operators built once
    out = jax.block_until_ready(decoder(x, skip))
    ref = jax.block_until_ready(_reference(x, skip, w_up, b_up, w_conv, b_conv))

    assert out.shape == (N, Cout, 2 * H, 2 * W), out.shape
    err = float(jnp.max(jnp.abs(out - ref)))
    assert jnp.allclose(out, ref, rtol=1e-4, atol=1e-4), err
    print("KERNEL_OK")
</pallas_src>

<mosaic_0001>
module attributes {stable_mosaic.version = 11 : i64} {
  func.func @_decoder_kernel(%arg0: i32, %arg1: memref<1x8x64xf32, #tpu.memory_space<vmem>>, %arg2: memref<1x16x128xf32, #tpu.memory_space<vmem>>, %arg3: memref<64x256xf32, #tpu.memory_space<vmem>>, %arg4: memref<16x16xf32, #tpu.memory_space<vmem>>, %arg5: memref<1x128xf32, #tpu.memory_space<vmem>>, %arg6: memref<3x256x128xf32, #tpu.memory_space<vmem>>, %arg7: memref<1x128xf32, #tpu.memory_space<vmem>>, %arg8: memref<1x16x128xf32, #tpu.memory_space<vmem>>) attributes {dimension_semantics = [#tpu.dimension_semantics<parallel>], iteration_bounds = array<i64: 2>, scalar_prefetch = 0 : i64, scratch_operands = 0 : i64, tpu.core_type = #tpu.core_type<tc>, window_params = [{transform_indices = @transform_0, window_bounds = array<i64: 1, 8, 64>}, {transform_indices = @transform_1, window_bounds = array<i64: 1, 16, 128>}, {pipeline_mode = #tpu.pipeline_mode<synchronous>, transform_indices = @transform_2, window_bounds = array<i64: 64, 256>}, {pipeline_mode = #tpu.pipeline_mode<synchronous>, transform_indices = @transform_3, window_bounds = array<i64: 16, 16>}, {pipeline_mode = #tpu.pipeline_mode<synchronous>, transform_indices = @transform_4, window_bounds = array<i64: 1, 128>}, {pipeline_mode = #tpu.pipeline_mode<synchronous>, transform_indices = @transform_5, window_bounds = array<i64: 3, 256, 128>}, {pipeline_mode = #tpu.pipeline_mode<synchronous>, transform_indices = @transform_6, window_bounds = array<i64: 1, 128>}, {transform_indices = @transform_7, window_bounds = array<i64: 1, 16, 128>}]} {
    %c0 = arith.constant 0 : index
    %c0_0 = arith.constant 0 : index
    %c0_1 = arith.constant 0 : index
    %0 = vector.load %arg1[%c0, %c0_0, %c0_1] : memref<1x8x64xf32, #tpu.memory_space<vmem>>, vector<1x8x64xf32>
    %1 = vector.shape_cast %0 : vector<1x8x64xf32> to vector<8x64xf32>
    %c0_2 = arith.constant 0 : index
    %c0_3 = arith.constant 0 : index
    %c0_4 = arith.constant 0 : index
    %2 = vector.load %arg2[%c0_2, %c0_3, %c0_4] : memref<1x16x128xf32, #tpu.memory_space<vmem>>, vector<1x16x128xf32>
    %3 = vector.shape_cast %2 : vector<1x16x128xf32> to vector<16x128xf32>
    %c0_5 = arith.constant 0 : index
    %c0_6 = arith.constant 0 : index
    %4 = vector.load %arg3[%c0_5, %c0_6] : memref<64x256xf32, #tpu.memory_space<vmem>>, vector<64x256xf32>
    %cst = arith.constant dense<0.000000e+00> : vector<8x256xf32>
    %5 = tpu.matmul %1, %4, %cst {dimension_numbers = #tpu.dot_dimension_numbers<[1], [0], [0], [1], [0, 0, 1, 1], [], []>} : vector<8x64xf32>, vector<64x256xf32>, vector<8x256xf32> -> vector<8x256xf32>
    %6 = vector.extract_strided_slice %5 {offsets = [0, 0], sizes = [8, 128], strides = [1, 1]} : vector<8x256xf32> to vector<8x128xf32>
    %7 = vector.extract_strided_slice %5 {offsets = [0, 128], sizes = [8, 128], strides = [1, 1]} : vector<8x256xf32> to vector<8x128xf32>
    %8 = tpu.concatenate %6, %7 in 0 : vector<8x128xf32>, vector<8x128xf32> -> vector<16x128xf32>
    %c0_7 = arith.constant 0 : index
    %c0_8 = arith.constant 0 : index
    %9 = vector.load %arg4[%c0_7, %c0_8] : memref<16x16xf32, #tpu.memory_space<vmem>>, vector<16x16xf32>
    %cst_9 = arith.constant dense<0.000000e+00> : vector<16x128xf32>
    %10 = tpu.matmul %9, %8, %cst_9 {dimension_numbers = #tpu.dot_dimension_numbers<[1], [0], [0], [1], [0, 0, 1, 1], [], []>} : vector<16x16xf32>, vector<16x128xf32>, vector<16x128xf32> -> vector<16x128xf32>
    %c0_10 = arith.constant 0 : index
    %c0_11 = arith.constant 0 : index
    %11 = vector.load %arg5[%c0_10, %c0_11] : memref<1x128xf32, #tpu.memory_space<vmem>>, vector<1x128xf32>
    %12 = vector.broadcast %11 : vector<1x128xf32> to vector<16x128xf32>
    %13 = arith.addf %10, %12 : vector<16x128xf32>
    %14 = tpu.concatenate %13, %3 in 1 : vector<16x128xf32>, vector<16x128xf32> -> vector<16x256xf32>
    %cst_12 = arith.constant 0.000000e+00 : f32
    %15 = vector.broadcast %cst_12 : f32 to vector<1x256xf32>
    %16 = tpu.concatenate %15, %14, %15 in 0 : vector<1x256xf32>, vector<16x256xf32>, vector<1x256xf32> -> vector<18x256xf32>
    %17 = vector.extract_strided_slice %16 {offsets = [0, 0], sizes = [16, 256], strides = [1, 1]} : vector<18x256xf32> to vector<16x256xf32>
    %c0_13 = arith.constant 0 : index
    %c0_14 = arith.constant 0 : index
    %c0_15 = arith.constant 0 : index
    %18 = vector.load %arg6[%c0_13, %c0_14, %c0_15] : memref<3x256x128xf32, #tpu.memory_space<vmem>>, vector<1x256x128xf32>
    %19 = vector.shape_cast %18 : vector<1x256x128xf32> to vector<256x128xf32>
    %cst_16 = arith.constant dense<0.000000e+00> : vector<16x128xf32>
    %20 = tpu.matmul %17, %19, %cst_16 {dimension_numbers = #tpu.dot_dimension_numbers<[1], [0], [0], [1], [0, 0, 1, 1], [], []>} : vector<16x256xf32>, vector<256x128xf32>, vector<16x128xf32> -> vector<16x128xf32>
    %21 = vector.extract_strided_slice %16 {offsets = [1, 0], sizes = [16, 256], strides = [1, 1]} : vector<18x256xf32> to vector<16x256xf32>
    %c1 = arith.constant 1 : index
    %c0_17 = arith.constant 0 : index
    %c0_18 = arith.constant 0 : index
    %22 = vector.load %arg6[%c1, %c0_17, %c0_18] : memref<3x256x128xf32, #tpu.memory_space<vmem>>, vector<1x256x128xf32>
    %23 = vector.shape_cast %22 : vector<1x256x128xf32> to vector<256x128xf32>
    %cst_19 = arith.constant dense<0.000000e+00> : vector<16x128xf32>
    %24 = tpu.matmul %21, %23, %cst_19 {dimension_numbers = #tpu.dot_dimension_numbers<[1], [0], [0], [1], [0, 0, 1, 1], [], []>} : vector<16x256xf32>, vector<256x128xf32>, vector<16x128xf32> -> vector<16x128xf32>
    %25 = arith.addf %20, %24 : vector<16x128xf32>
    %26 = vector.extract_strided_slice %16 {offsets = [2, 0], sizes = [16, 256], strides = [1, 1]} : vector<18x256xf32> to vector<16x256xf32>
    %c2 = arith.constant 2 : index
    %c0_20 = arith.constant 0 : index
    %c0_21 = arith.constant 0 : index
    %27 = vector.load %arg6[%c2, %c0_20, %c0_21] : memref<3x256x128xf32, #tpu.memory_space<vmem>>, vector<1x256x128xf32>
    %28 = vector.shape_cast %27 : vector<1x256x128xf32> to vector<256x128xf32>
    %cst_22 = arith.constant dense<0.000000e+00> : vector<16x128xf32>
    %29 = tpu.matmul %26, %28, %cst_22 {dimension_numbers = #tpu.dot_dimension_numbers<[1], [0], [0], [1], [0, 0, 1, 1], [], []>} : vector<16x256xf32>, vector<256x128xf32>, vector<16x128xf32> -> vector<16x128xf32>
    %30 = arith.addf %25, %29 : vector<16x128xf32>
    %c0_23 = arith.constant 0 : index
    %c0_24 = arith.constant 0 : index
    %31 = vector.load %arg7[%c0_23, %c0_24] : memref<1x128xf32, #tpu.memory_space<vmem>>, vector<1x128xf32>
    %32 = vector.broadcast %31 : vector<1x128xf32> to vector<16x128xf32>
    %33 = arith.addf %30, %32 : vector<16x128xf32>
    %cst_25 = arith.constant dense<0.000000e+00> : vector<128xf32>
    %34 = vector.multi_reduction <add>, %33, %cst_25 [0] : vector<16x128xf32> to vector<128xf32>
    %35 = vector.shape_cast %34 : vector<128xf32> to vector<1x128xf32>
    %c8_i32 = arith.constant 8 : i32
    %36 = tpu.dynamic_rotate %35 by %c8_i32 dim 1 : vector<1x128xf32>, i32 -> vector<1x128xf32>
    %37 = arith.addf %35, %36 : vector<1x128xf32>
    %c16_i32 = arith.constant 16 : i32
    %38 = tpu.dynamic_rotate %37 by %c16_i32 dim 1 : vector<1x128xf32>, i32 -> vector<1x128xf32>
    %39 = arith.addf %37, %38 : vector<1x128xf32>
    %c32_i32 = arith.constant 32 : i32
    %40 = tpu.dynamic_rotate %39 by %c32_i32 dim 1 : vector<1x128xf32>, i32 -> vector<1x128xf32>
    %41 = arith.addf %39, %40 : vector<1x128xf32>
    %c64_i32 = arith.constant 64 : i32
    %42 = tpu.dynamic_rotate %41 by %c64_i32 dim 1 : vector<1x128xf32>, i32 -> vector<1x128xf32>
    %43 = arith.addf %41, %42 : vector<1x128xf32>
    %cst_26 = arith.constant 3.906250e-03 : f32
    %44 = vector.broadcast %cst_26 : f32 to vector<1x128xf32>
    %45 = arith.mulf %43, %44 : vector<1x128xf32>
    %46 = vector.broadcast %45 : vector<1x128xf32> to vector<16x128xf32>
    %47 = arith.subf %33, %46 : vector<16x128xf32>
    %48 = arith.mulf %47, %47 : vector<16x128xf32>
    %cst_27 = arith.constant dense<0.000000e+00> : vector<128xf32>
    %49 = vector.multi_reduction <add>, %48, %cst_27 [0] : vector<16x128xf32> to vector<128xf32>
    %50 = vector.shape_cast %49 : vector<128xf32> to vector<1x128xf32>
    %c8_i32_28 = arith.constant 8 : i32
    %51 = tpu.dynamic_rotate %50 by %c8_i32_28 dim 1 : vector<1x128xf32>, i32 -> vector<1x128xf32>
    %52 = arith.addf %50, %51 : vector<1x128xf32>
    %c16_i32_29 = arith.constant 16 : i32
    %53 = tpu.dynamic_rotate %52 by %c16_i32_29 dim 1 : vector<1x128xf32>, i32 -> vector<1x128xf32>
    %54 = arith.addf %52, %53 : vector<1x128xf32>
    %c32_i32_30 = arith.constant 32 : i32
    %55 = tpu.dynamic_rotate %54 by %c32_i32_30 dim 1 : vector<1x128xf32>, i32 -> vector<1x128xf32>
    %56 = arith.addf %54, %55 : vector<1x128xf32>
    %c64_i32_31 = arith.constant 64 : i32
    %57 = tpu.dynamic_rotate %56 by %c64_i32_31 dim 1 : vector<1x128xf32>, i32 -> vector<1x128xf32>
    %58 = arith.addf %56, %57 : vector<1x128xf32>
    %cst_32 = arith.constant 3.906250e-03 : f32
    %59 = vector.broadcast %cst_32 : f32 to vector<1x128xf32>
    %60 = arith.mulf %58, %59 : vector<1x128xf32>
    %cst_33 = arith.constant 9.99999974E-6 : f32
    %61 = vector.broadcast %cst_33 : f32 to vector<1x128xf32>
    %62 = arith.addf %60, %61 : vector<1x128xf32>
    %63 = math.rsqrt %62 : vector<1x128xf32>
    %64 = vector.broadcast %63 : vector<1x128xf32> to vector<16x128xf32>
    %65 = arith.mulf %47, %64 : vector<16x128xf32>
    %cst_34 = arith.constant 5.000000e-01 : f32
    %66 = vector.broadcast %cst_34 : f32 to vector<16x128xf32>
    %67 = arith.mulf %66, %65 : vector<16x128xf32>
    %cst_35 = arith.constant 0.707106769 : f32
    %68 = vector.broadcast %cst_35 : f32 to vector<16x128xf32>
    %69 = arith.mulf %65, %68 : vector<16x128xf32>
    %70 = math.erf %69 : vector<16x128xf32>
    %cst_36 = arith.constant 1.000000e+00 : f32
    %71 = vector.broadcast %cst_36 : f32 to vector<16x128xf32>
    %72 = arith.addf %71, %70 : vector<16x128xf32>
    %73 = arith.mulf %67, %72 : vector<16x128xf32>
    %c0_37 = arith.constant 0 : index
    %c0_38 = arith.constant 0 : index
    %c0_39 = arith.constant 0 : index
    %74 = vector.load %arg8[%c0_37, %c0_38, %c0_39] : memref<1x16x128xf32, #tpu.memory_space<vmem>>, vector<1x16x128xf32>
    %75 = vector.shape_cast %74 : vector<1x16x128xf32> to vector<16x128xf32>
    %76 = vector.shape_cast %73 : vector<16x128xf32> to vector<1x16x128xf32>
    tpu.vector_store %arg8[%c0_37, %c0_38, %c0_39], %76 {strides = array<i32>} : memref<1x16x128xf32, #tpu.memory_space<vmem>>, vector<1x16x128xf32>,
    return
  }
  func.func @transform_0(%arg0: i32) -> (i32, i32, i32) {
    %c0_i32 = arith.constant 0 : i32
    %c0_i32_0 = arith.constant 0 : i32
    %c0_i32_1 = arith.constant 0 : i32
    return %arg0, %c0_i32, %c0_i32_0 : i32, i32, i32
  }
  func.func @transform_1(%arg0: i32) -> (i32, i32, i32) {
    %c0_i32 = arith.constant 0 : i32
    %c0_i32_0 = arith.constant 0 : i32
    %c0_i32_1 = arith.constant 0 : i32
    return %arg0, %c0_i32, %c0_i32_0 : i32, i32, i32
  }
  func.func @transform_2(%arg0: i32) -> (i32, i32) {
    %c0_i32 = arith.constant 0 : i32
    %c0_i32_0 = arith.constant 0 : i32
    %c0_i32_1 = arith.constant 0 : i32
    return %c0_i32, %c0_i32_0 : i32, i32
  }
  func.func @transform_3(%arg0: i32) -> (i32, i32) {
    %c0_i32 = arith.constant 0 : i32
    %c0_i32_0 = arith.constant 0 : i32
    %c0_i32_1 = arith.constant 0 : i32
    return %c0_i32, %c0_i32_0 : i32, i32
  }
  func.func @transform_4(%arg0: i32) -> (i32, i32) {
    %c0_i32 = arith.constant 0 : i32
    %c0_i32_0 = arith.constant 0 : i32
    %c0_i32_1 = arith.constant 0 : i32
    return %c0_i32, %c0_i32_0 : i32, i32
  }
  func.func @transform_5(%arg0: i32) -> (i32, i32, i32) {
    %c0_i32 = arith.constant 0 : i32
    %c0_i32_0 = arith.constant 0 : i32
    %c0_i32_1 = arith.constant 0 : i32
    %c0_i32_2 = arith.constant 0 : i32
    return %c0_i32, %c0_i32_0, %c0_i32_1 : i32, i32, i32
  }
  func.func @transform_6(%arg0: i32) -> (i32, i32) {
    %c0_i32 = arith.constant 0 : i32
    %c0_i32_0 = arith.constant 0 : i32
    %c0_i32_1 = arith.constant 0 : i32
    return %c0_i32, %c0_i32_0 : i32, i32
  }
  func.func @transform_7(%arg0: i32) -> (i32, i32, i32) {
    %c0_i32 = arith.constant 0 : i32
    %c0_i32_0 = arith.constant 0 : i32
    %c0_i32_1 = arith.constant 0 : i32
    return %arg0, %c0_i32, %c0_i32_0 : i32, i32, i32
  }
}

</mosaic_0001>

<llo_original>
// kernel: apply.1
$region0: #{apply.1}
  #allocation0 [shape = 'u32[]', space=smem, size = 0x4, offset = 0x4, fixed_abs, tag = 'smem constant byte address 0x4 - core index']
  #allocation1 [shape = 'u32[144,128]{1,0:T(1,128)}', space=vmem, size = 0x12000, scoped, tag = 'internal scratch']
  %s0 = inlined_call_operand.vmem [shape: f32[2,8,64], index: 0, kind: input, shape index: {}]
  %s1 = inlined_call_operand.vmem [shape: f32[2,16,128], index: 1, kind: input, shape index: {}]
  %s2 = inlined_call_operand.vmem [shape: f32[64,256], index: 2, kind: input, shape index: {}]
  %s3 = inlined_call_operand.vmem [shape: f32[16,16], index: 3, kind: input, shape index: {}]
  %s4 = inlined_call_operand.vmem [shape: f32[1,128], index: 4, kind: input, shape index: {}]
  %s5 = inlined_call_operand.vmem [shape: f32[3,256,128], index: 5, kind: input, shape index: {}]
  %s6 = inlined_call_operand.vmem [shape: f32[1,128], index: 6, kind: input, shape index: {}]
  %s7 = inlined_call_operand.vmem [shape: f32[2,16,128], index: 7, kind: output, shape index: {}]
  %s8 = sld [smem:[#allocation0]]
  $region61: #{apply.1} parent=0
    _
  %s10 = ssub.s32 1, %s8
  %s11 = scalar_select 0, %s10, %s8
  loop: start=0, step=1, limit=4
  $region2: #{apply.1} parent=0 // loop_pre_header
    _
  $region3: #{apply.1} parent=0 // loop_header
    %s13 = sphi 0, %s17
    %p14 = scmp.ge.s32.totalorder %s13, 4
    %s23 = sphi 0, %s25
    %s26 = sphi 0, %s23
    %s27 = sphi 0, %s26
    %s43 = sphi 0, %s27
    %s49 = sphi 0, %s51
    %s52 = sphi 0, %s49
    %s53 = sphi 0, %s52
    %s69 = sphi 0, %s53
    %s73 = sphi 0, %s73
    %s75 = sphi 0, %s73
    %s76 = sphi 0, %s75
    %s90 = sphi 0, %s76
    %s94 = sphi 0, %s94
    %s96 = sphi 0, %s94
    %s97 = sphi 0, %s96
    %s111 = sphi 0, %s97
    %s115 = sphi 0, %s115
    %s117 = sphi 0, %s115
    %s118 = sphi 0, %s117
    %s132 = sphi 0, %s118
    %s136 = sphi 0, %s136
    %s138 = sphi 0, %s136
    %s139 = sphi 0, %s138
    %s153 = sphi 0, %s139
    %s157 = sphi 0, %s157
    %s159 = sphi 0, %s157
    %s160 = sphi 0, %s159
    %s174 = sphi 0, %s160
    %s180 = sphi 0, %s182
    %s183 = sphi 0, %s180
    %s184 = sphi 0, %s183
    %s200 = sphi 0, %s184
  $region4: #{apply.1} parent=0 // loop_header_branch
    %16 = sbr.rel (%p14) target = $region8
  $region5: #{apply.1} parent=0 // loop_body
    %s18 = ssub.s32 %s13, 1
    %s19 = ssub.s32 %s13, 2
    %s20 = sadd.s32 %s13, 1
    %s21 = ssub.s32 %s13, %s20
    %p22 = scmp.eq.s32.totalorder %s21, 0
    %s24 = sadd.s32 %s23, 1
    %s25 = scalar_select %p22, %s23, %s24
    %p28 = pneg %p22
    %p29 = scmp.eq.s32.totalorder %s13, 1
    %p30 = por %p28, %p29
    %p31 = scmp.ne.s32.totalorder %s23, %s26
    %p32 = scmp.eq.s32.totalorder %s13, 0
    %p33 = por %p31, %p32
    %p34 = scmp.ne.s32.totalorder %s23, %s26
    %p35 = scmp.eq.s32.totalorder %s18, 1
    %p36 = por %p34, %p35
    %p37 = scmp.ne.s32.totalorder %s26, %s27
    %p38 = scmp.eq.s32.totalorder %s18, 0
    %p39 = por %p37, %p38
    %p40 = scmp.ne.s32.totalorder %s26, %s27
    %p41 = scmp.eq.s32.totalorder %s19, 1
    %p42 = por %p40, %p41
    %p44 = scmp.ne.s32.totalorder %s27, %s43
    %p45 = scmp.eq.s32.totalorder %s19, 0
    %p46 = por %p44, %p45
    %s47 = ssub.s32 %s13, %s20
    %p48 = scmp.eq.s32.totalorder %s47, 0
    %s50 = sadd.s32 %s49, 1
    %s51 = scalar_select %p48, %s49, %s50
    %p54 = pneg %p48
    %p55 = scmp.eq.s32.totalorder %s13, 1
    %p56 = por %p54, %p55
    %p57 = scmp.ne.s32.totalorder %s49, %s52
    %p58 = scmp.eq.s32.totalorder %s13, 0
    %p59 = por %p57, %p58
    %p60 = scmp.ne.s32.totalorder %s49, %s52
    %p61 = scmp.eq.s32.totalorder %s18, 1
    %p62 = por %p60, %p61
    %p63 = scmp.ne.s32.totalorder %s52, %s53
    %p64 = scmp.eq.s32.totalorder %s18, 0
    %p65 = por %p63, %p64
    %p66 = scmp.ne.s32.totalorder %s52, %s53
    %p67 = scmp.eq.s32.totalorder %s19, 1
    %p68 = por %p66, %p67
    %p70 = scmp.ne.s32.totalorder %s53, %s69
    %p71 = scmp.eq.s32.totalorder %s19, 0
    %p72 = por %p70, %p71
    %s74 = sadd.s32 %s73, 1
    %p77 = scmp.eq.s32.totalorder %s13, 1
    %p78 = scmp.ne.s32.totalorder %s73, %s75
    %p79 = scmp.eq.s32.totalorder %s13, 0
    %p80 = por %p78, %p79
    %p81 = scmp.ne.s32.totalorder %s73, %s75
    %p82 = scmp.eq.s32.totalorder %s18, 1
    %p83 = por %p81, %p82
    %p84 = scmp.ne.s32.totalorder %s75, %s76
    %p85 = scmp.eq.s32.totalorder %s18, 0
    %p86 = por %p84, %p85
    %p87 = scmp.ne.s32.totalorder %s75, %s76
    %p88 = scmp.eq.s32.totalorder %s19, 1
    %p89 = por %p87, %p88
    %p91 = scmp.ne.s32.totalorder %s76, %s90
    %p92 = scmp.eq.s32.totalorder %s19, 0
    %p93 = por %p91, %p92
    %s95 = sadd.s32 %s94, 1
    %p98 = scmp.eq.s32.totalorder %s13, 1
    %p99 = scmp.ne.s32.totalorder %s94, %s96
    %p100 = scmp.eq.s32.totalorder %s13, 0
    %p101 = por %p99, %p100
    %p102 = scmp.ne.s32.totalorder %s94, %s96
    %p103 = scmp.eq.s32.totalorder %s18, 1
    %p104 = por %p102, %p103
    %p105 = scmp.ne.s32.totalorder %s96, %s97
    %p106 = scmp.eq.s32.totalorder %s18, 0
    %p107 = por %p105, %p106
    %p108 = scmp.ne.s32.totalorder %s96, %s97
    %p109 = scmp.eq.s32.totalorder %s19, 1
    %p110 = por %p108, %p109
    %p112 = scmp.ne.s32.totalorder %s97, %s111
    %p113 = scmp.eq.s32.totalorder %s19, 0
    %p114 = por %p112, %p113
    %s116 = sadd.s32 %s115, 1
    %p119 = scmp.eq.s32.totalorder %s13, 1
    %p120 = scmp.ne.s32.totalorder %s115, %s117
    %p121 = scmp.eq.s32.totalorder %s13, 0
    %p122 = por %p120, %p121
    %p123 = scmp.ne.s32.totalorder %s115, %s117
    %p124 = scmp.eq.s32.totalorder %s18, 1
    %p125 = por %p123, %p124
    %p126 = scmp.ne.s32.totalorder %s117, %s118
    %p127 = scmp.eq.s32.totalorder %s18, 0
    %p128 = por %p126, %p127
    %p129 = scmp.ne.s32.totalorder %s117, %s118
    %p130 = scmp.eq.s32.totalorder %s19, 1
    %p131 = por %p129, %p130
    %p133 = scmp.ne.s32.totalorder %s118, %s132
    %p134 = scmp.eq.s32.totalorder %s19, 0
    %p135 = por %p133, %p134
    %s137 = sadd.s32 %s136, 1
    %p140 = scmp.eq.s32.totalorder %s13, 1
    %p141 = scmp.ne.s32.totalorder %s136, %s138
    %p142 = scmp.eq.s32.totalorder %s13, 0
    %p143 = por %p141, %p142
    %p144 = scmp.ne.s32.totalorder %s136, %s138
    %p145 = scmp.eq.s32.totalorder %s18, 1
    %p146 = por %p144, %p145
    %p147 = scmp.ne.s32.totalorder %s138, %s139
    %p148 = scmp.eq.s32.totalorder %s18, 0
    %p149 = por %p147, %p148
    %p150 = scmp.ne.s32.totalorder %s138, %s139
    %p151 = scmp.eq.s32.totalorder %s19, 1
    %p152 = por %p150, %p151
    %p154 = scmp.ne.s32.totalorder %s139, %s153
    %p155 = scmp.eq.s32.totalorder %s19, 0
    %p156 = por %p154, %p155
    %s158 = sadd.s32 %s157, 1
    %p161 = scmp.eq.s32.totalorder %s13, 1
    %p162 = scmp.ne.s32.totalorder %s157, %s159
    %p163 = scmp.eq.s32.totalorder %s13, 0
    %p164 = por %p162, %p163
    %p165 = scmp.ne.s32.totalorder %s157, %s159
    %p166 = scmp.eq.s32.totalorder %s18, 1
    %p167 = por %p165, %p166
    %p168 = scmp.ne.s32.totalorder %s159, %s160
    %p169 = scmp.eq.s32.totalorder %s18, 0
    %p170 = por %p168, %p169
    %p171 = scmp.ne.s32.totalorder %s159, %s160
    %p172 = scmp.eq.s32.totalorder %s19, 1
    %p173 = por %p171, %p172
    %p175 = scmp.ne.s32.totalorder %s160, %s174
    %p176 = scmp.eq.s32.totalorder %s19, 0
    %p177 = por %p175, %p176
    %s178 = ssub.s32 %s13, %s20
    %p179 = scmp.eq.s32.totalorder %s178, 0
    %s181 = sadd.s32 %s180, 1
    %s182 = scalar_select %p179, %s180, %s181
    %p185 = pneg %p179
    %p186 = scmp.eq.s32.totalorder %s13, 1
    %p187 = por %p185, %p186
    %p188 = scmp.ne.s32.totalorder %s180, %s183
    %p189 = scmp.eq.s32.totalorder %s13, 0
    %p190 = por %p188, %p189
    %p191 = scmp.ne.s32.totalorder %s180, %s183
    %p192 = scmp.eq.s32.totalorder %s18, 1
    %p193 = por %p191, %p192
    %p194 = scmp.ne.s32.totalorder %s183, %s184
    %p195 = scmp.eq.s32.totalorder %s18, 0
    %p196 = por %p194, %p195
    %p197 = scmp.ne.s32.totalorder %s183, %s184
    %p198 = scmp.eq.s32.totalorder %s19, 1
    %p199 = por %p197, %p198
    %p201 = scmp.ne.s32.totalorder %s184, %s200
    %p202 = scmp.eq.s32.totalorder %s19, 0
    %p203 = por %p201, %p202
    %p204 = scmp.le.s32.totalorder 1, %s13
    %p205 = scmp.lt.s32.totalorder %s13, 3
    %p206 = pnand %p204, %p205
    %p207 = pneg %p206
    // Predicated region
    $region9: #{apply.1} parent=5 // pred_check
      _
    $region10: #{apply.1} parent=5 // pred_check_branch
      %209 = sbr.rel (%p206) target = $region12
    $region11: #{apply.1} parent=5 // pred_region
      %s210 = ssub.s32 %s13, 1
      // Predicated region
      $region13: #{apply.1} parent=11 // pred_check
        %p211 = pneg %p86
      $region14: #{apply.1} parent=11 // pred_check_branch
        %213 = sbr.rel (%p211) target = $region16
      $region15: #{apply.1} parent=11 // pred_region
        _
      $region16: #{apply.1} parent=11 // pred_fallthru
        _
      // Predicated region
      $region17: #{apply.1} parent=11 // pred_check
        %p214 = pneg %p107
      $region18: #{apply.1} parent=11 // pred_check_branch
        %216 = sbr.rel (%p214) target = $region20
      $region19: #{apply.1} parent=11 // pred_region
        _
      $region20: #{apply.1} parent=11 // pred_fallthru
        _
      // Predicated region
      $region21: #{apply.1} parent=11 // pred_check
        %p217 = pneg %p128
      $region22: #{apply.1} parent=11 // pred_check_branch
        %219 = sbr.rel (%p217) target = $region24
      $region23: #{apply.1} parent=11 // pred_region
        _
      $region24: #{apply.1} parent=11 // pred_fallthru
        _
      // Predicated region
      $region25: #{apply.1} parent=11 // pred_check
        %p220 = pneg %p149
      $region26: #{apply.1} parent=11 // pred_check_branch
        %222 = sbr.rel (%p220) target = $region28
      $region27: #{apply.1} parent=11 // pred_region
        _
      $region28: #{apply.1} parent=11 // pred_fallthru
        _
      // Predicated region
      $region29: #{apply.1} parent=11 // pred_check
        %p223 = pneg %p170
      $region30: #{apply.1} parent=11 // pred_check_branch
        %225 = sbr.rel (%p223) target = $region32
      $region31: #{apply.1} parent=11 // pred_region
        _
      $region32: #{apply.1} parent=11 // pred_fallthru
        _
    $region12: #{apply.1} parent=5 // pred_fallthru
      _
    %p226 = scmp.lt.s32.totalorder %s13, 2
    // Predicated region
    $region33: #{apply.1} parent=5 // pred_check
      %p227 = pneg %p226
    $region34: #{apply.1} parent=5 // pred_check_branch
      %229 = sbr.rel (%p227) target = $region36
    $region35: #{apply.1} parent=5 // pred_region
      // Predicated region
      $region37: #{apply.1} parent=35 // pred_check
        %p230 = pneg %p33
      $region38: #{apply.1} parent=35 // pred_check_branch
        %232 = sbr.rel (%p230) target = $region40
      $region39: #{apply.1} parent=35 // pred_region
        %p233 = scmp.lt.s32.totalorder %s13, 1
        %s234 = scalar_select %p233, %s13, 1
        %s235 = smul.addr %s234, 8
        %s236 = scalar_lea.vmem %s0, %s235
      $region40: #{apply.1} parent=35 // pred_fallthru
        _
      // Predicated region
      $region41: #{apply.1} parent=35 // pred_check
        %p237 = pneg %p59
      $region42: #{apply.1} parent=35 // pred_check_branch
        %239 = sbr.rel (%p237) target = $region44
      $region43: #{apply.1} parent=35 // pred_region
        %p240 = scmp.lt.s32.totalorder %s13, 1
        %s241 = scalar_select %p240, %s13, 1
        %s242 = smul.addr %s241, 2
        %s243 = smul.addr %s242, 8
        %s244 = scalar_lea.vmem %s1, %s243
      $region44: #{apply.1} parent=35 // pred_fallthru
        _
    $region36: #{apply.1} parent=5 // pred_fallthru
      _
    %p245 = scmp.le.s32.totalorder 1, %s13
    %p246 = scmp.lt.s32.totalorder %s13, 3
    %p247 = pnand %p245, %p246
    %p248 = pneg %p247
    // Predicated region
    $region45: #{apply.1} parent=5 // pred_check
      _
    $region46: #{apply.1} parent=5 // pred_check_branch
      %250 = sbr.rel (%p247) target = $region48
    $region47: #{apply.1} parent=5 // pred_region
      %s251 = ssub.s32 %s13, 1
      %p252 = scmp.lt.s32.totalorder %s18, 1
      %s253 = scalar_select %p252, %s18, 1
      %s254 = smul.addr %s253, 8
      %s255 = scalar_lea.vmem %s0, %s254
      %p256 = pneg %p39
      %p257 = pneg %p36
      %p258 = scmp.lt.s32.totalorder %s18, 1
      %s259 = scalar_select %p258, %s18, 1
      %s260 = smul.addr %s259, 2
      %s261 = smul.addr %s260, 8
      %s262 = scalar_lea.vmem %s1, %s261
      %p263 = pneg %p65
      %p264 = pneg %p62
      %p265 = pneg %p86
      %p266 = pneg %p83
      %p267 = pneg %p107
      %p268 = pneg %p104
      %p269 = pneg %p128
      %p270 = pneg %p125
      %p271 = pneg %p149
      %p272 = pneg %p146
      %p273 = pneg %p170
      %p274 = pneg %p167
      %p275 = pneg %p196
      %p276 = pneg %p193
      %p277 = scmp.lt.s32.totalorder %s18, 1
      %s278 = scalar_select %p277, %s18, 1
      %s279 = smul.addr %s278, 2
      %s280 = smul.addr %s279, 8
      %s281 = scalar_lea.vmem %s7, %s280
      %p282 = scmp.lt.s32.totalorder %s18, 1
      %s283 = scalar_select %p282, %s18, 1
      %s284 = smul.addr %s283, 8
      %s285 = scalar_lea.vmem %s0, %s284
      %p286 = scmp.lt.s32.totalorder %s18, 1
      %s287 = scalar_select %p286, %s18, 1
      %s288 = smul.addr %s287, 2
      %s289 = smul.addr %s288, 8
      %s290 = scalar_lea.vmem %s1, %s289
      %p291 = scmp.lt.s32.totalorder %s18, 1
      %s292 = scalar_select %p291, %s18, 1
      %s293 = smul.addr %s292, 2
      %s294 = smul.addr %s293, 8
      %s295 = scalar_lea.vmem %s7, %s294
      %v296 = vld [vmem:[%s285] sm:$0xff]
      %v297 = vld [vmem:[%s290] sm:$0xff]
      %v298 = vld [vmem:[%s290 + $0x8] sm:$0xff]
      %v299 = vld [vmem:[%s2] sm:$0xff]
      %v300 = vld [vmem:[%s2 + $0x8] sm:$0xff]
      %v301 = vld [vmem:[%s2 + $0x10] sm:$0xff]
      %v302 = vld [vmem:[%s2 + $0x18] sm:$0xff]
      %v303 = vld [vmem:[%s2 + $0x20] sm:$0xff]
      %v304 = vld [vmem:[%s2 + $0x28] sm:$0xff]
      %v305 = vld [vmem:[%s2 + $0x30] sm:$0xff]
      %v306 = vld [vmem:[%s2 + $0x38] sm:$0xff]
      %v307 = vld [vmem:[%s2 + $0x40] sm:$0xff]
      %v308 = vld [vmem:[%s2 + $0x48] sm:$0xff]
      %v309 = vld [vmem:[%s2 + $0x50] sm:$0xff]
      %v310 = vld [vmem:[%s2 + $0x58] sm:$0xff]
      %v311 = vld [vmem:[%s2 + $0x60] sm:$0xff]
      %v312 = vld [vmem:[%s2 + $0x68] sm:$0xff]
      %v313 = vld [vmem:[%s2 + $0x70] sm:$0xff]
      %v314 = vld [vmem:[%s2 + $0x78] sm:$0xff]
      %vm315 = vcmask 523264
      %v317 = vsel %vm315, %v296, 0
      %319 = vmatprep.subr.mxu0 0.0
      %320 = vmatpush1.msra.mxu0 0.0
      %321 = vmatprep.subr.mxu0 0.0
      %322 = vmatpush1.msra.mxu0 0.0
      %323 = vmatprep.subr.mxu0 0.0
      %324 = vmatpush1.msra.mxu0 0.0
      %325 = vmatprep.subr.mxu0 0.0
      %326 = vmatpush1.msra.mxu0 0.0
      %327 = vmatprep.subr.mxu0 0.0
      %328 = vmatpush1.msra.mxu0 0.0
      %329 = vmatprep.subr.mxu0 0.0
      %330 = vmatpush1.msra.mxu0 0.0
      %331 = vmatprep.subr.mxu0 0.0
      %332 = vmatpush1.msra.mxu0 0.0
      %333 = vmatprep.subr.mxu0 0.0
      %334 = vmatpush1.msra.mxu0 0.0
      %335 = vmatprep.subr.mxu0 %v314
      %336 = vmatpush1.msra.mxu0 %v313
      %337 = vmatprep.subr.mxu0 %v312
      %338 = vmatpush1.msra.mxu0 %v311
      %339 = vmatprep.subr.mxu0 %v310
      %340 = vmatpush1.msra.mxu0 %v309
      %341 = vmatprep.subr.mxu0 %v308
      %342 = vmatpush1.msra.mxu0 %v307
      %343 = vmatprep.subr.mxu0 %v306
      %344 = vmatpush1.msra.mxu0 %v305
      %345 = vmatprep.subr.mxu0 %v304
      %346 = vmatpush1.msra.mxu0 %v303
      %347 = vmatprep.subr.mxu0 %v302
      %348 = vmatpush1.msra.mxu0 %v301
      %349 = vmatprep.subr.mxu0 %v300
      %350 = vmatpush1.msra.mxu0 %v299
      %351 = vmatprep.subr.mxu0 0.0
      %352 = vmatpush2.msra.mxu0 0.0
      %353 = vmatprep.subr.mxu0 0.0
      %354 = vmatpush2.msra.mxu0 0.0
      %355 = vmatprep.subr.mxu0 0.0
      %356 = vmatpush2.msra.mxu0 0.0
      %357 = vmatprep.subr.mxu0 0.0
      %358 = vmatpush2.msra.mxu0 0.0
      %359 = vmatprep.subr.mxu0 0.0
      %360 = vmatpush2.msra.mxu0 0.0
      %361 = vmatprep.subr.mxu0 0.0
      %362 = vmatpush2.msra.mxu0 0.0
      %363 = vmatprep.subr.mxu0 0.0
      %364 = vmatpush2.msra.mxu0 0.0
      %365 = vmatprep.subr.mxu0 0.0
      %366 = vmatpush2.msra.mxu0 0.0
      %367 = vmatprep.subr.mxu0 0.0
      %368 = vmatpush2.msra.mxu0 0.0
      %369 = vmatprep.subr.mxu0 0.0
      %370 = vmatpush2.msra.mxu0 0.0
      %371 = vmatprep.subr.mxu0 0.0
      %372 = vmatpush2.msra.mxu0 0.0
      %373 = vmatprep.subr.mxu0 0.0
      %374 = vmatpush2.msra.mxu0 0.0
      %375 = vmatprep.subr.mxu0 0.0
      %376 = vmatpush2.msra.mxu0 0.0
      %377 = vmatprep.subr.mxu0 0.0
      %378 = vmatpush2.msra.mxu0 0.0
      %379 = vmatprep.subr.mxu0 0.0
      %380 = vmatpush2.msra.mxu0 0.0
      %381 = vmatprep.subr.mxu0 0.0
      %382 = vmatpush2.msra.mxu0 0.0
      %383 = vmatprep.mubr.f32.mxu0 0.0
      %384 = vmatmul.mubr.f32.gmra.mxu0 %v317
      %v385 = vpop.f32.mrf.mxu0
      %v386 = vadd.f32 0.0, %v385
      %v387 = vpop.f32.mrf.mxu0
      %v388 = vadd.f32 0.0, %v387
      %389 = vdwg.mxu0
      %v390 = vld [vmem:[%s3] sm:$0xff]
      %v391 = vld [vmem:[%s3 + $0x8] sm:$0xff]
      %v392 = vld [vmem:[%s4] sm:$0x1]
      %v394 = vlaneseq
      %v395 = vshrl.u32 %v394, 7
      %v396 = vsub.s32 0, %v395
      %v397 = vrot.slane %v392, %v396
      %vm399 = vcmask 130048
      %v401 = vsel %vm399, %v390, 0
      %v404 = vsel %vm399, %v391, 0
      %406 = vmatprep.subr.mxu0 0.0
      %407 = vmatpush1.msra.mxu0 0.0
      %408 = vmatprep.subr.mxu0 0.0
      %409 = vmatpush1.msra.mxu0 0.0
      %410 = vmatprep.subr.mxu0 0.0
      %411 = vmatpush1.msra.mxu0 0.0
      %412 = vmatprep.subr.mxu0 0.0
      %413 = vmatpush1.msra.mxu0 0.0
      %414 = vmatprep.subr.mxu0 0.0
      %415 = vmatpush1.msra.mxu0 0.0
      %416 = vmatprep.subr.mxu0 0.0
      %417 = vmatpush1.msra.mxu0 0.0
      %418 = vmatprep.subr.mxu0 0.0
      %419 = vmatpush1.msra.mxu0 0.0
      %420 = vmatprep.subr.mxu0 0.0
      %421 = vmatpush1.msra.mxu0 0.0
      %422 = vmatprep.subr.mxu0 0.0
      %423 = vmatpush1.msra.mxu0 0.0
      %424 = vmatprep.subr.mxu0 0.0
      %425 = vmatpush1.msra.mxu0 0.0
      %426 = vmatprep.subr.mxu0 0.0
      %427 = vmatpush1.msra.mxu0 0.0
      %428 = vmatprep.subr.mxu0 0.0
      %429 = vmatpush1.msra.mxu0 0.0
      %430 = vmatprep.subr.mxu0 0.0
      %431 = vmatpush1.msra.mxu0 0.0
      %432 = vmatprep.subr.mxu0 0.0
      %433 = vmatpush1.msra.mxu0 0.0
      %434 = vmatprep.subr.mxu0 0.0
      %435 = vmatpush1.msra.mxu0 %v388
      %436 = vmatprep.subr.mxu0 0.0
      %437 = vmatpush1.msra.mxu0 %v386
      %438 = vmatprep.subr.mxu0 0.0
      %439 = vmatpush2.msra.mxu0 0.0
      %440 = vmatprep.subr.mxu0 0.0
      %441 = vmatpush2.msra.mxu0 0.0
      %442 = vmatprep.subr.mxu0 0.0
      %443 = vmatpush2.msra.mxu0 0.0
      %444 = vmatprep.subr.mxu0 0.0
      %445 = vmatpush2.msra.mxu0 0.0
      %446 = vmatprep.subr.mxu0 0.0
      %447 = vmatpush2.msra.mxu0 0.0
      %448 = vmatprep.subr.mxu0 0.0
      %449 = vmatpush2.msra.mxu0 0.0
      %450 = vmatprep.subr.mxu0 0.0
      %451 = vmatpush2.msra.mxu0 0.0
      %452 = vmatprep.subr.mxu0 0.0
      %453 = vmatpush2.msra.mxu0 0.0
      %454 = vmatprep.subr.mxu0 0.0
      %455 = vmatpush2.msra.mxu0 0.0
      %456 = vmatprep.subr.mxu0 0.0
      %457 = vmatpush2.msra.mxu0 0.0
      %458 = vmatprep.subr.mxu0 0.0
      %459 = vmatpush2.msra.mxu0 0.0
      %460 = vmatprep.subr.mxu0 0.0
      %461 = vmatpush2.msra.mxu0 0.0
      %462 = vmatprep.subr.mxu0 0.0
      %463 = vmatpush2.msra.mxu0 0.0
      %464 = vmatprep.subr.mxu0 0.0
      %465 = vmatpush2.msra.mxu0 0.0
      %466 = vmatprep.subr.mxu0 0.0
      %467 = vmatpush2.msra.mxu0 0.0
      %468 = vmatprep.subr.mxu0 0.0
      %469 = vmatpush2.msra.mxu0 0.0
      %470 = vmatprep.mubr.f32.mxu0 0.0
      %471 = vmatmul.mubr.f32.gmra.mxu0 %v401
      %v472 = vpop.f32.mrf.mxu0
      %v473 = vadd.f32 %v397, %v472
      %v474 = vpop.f32.mrf.mxu0
      %475 = vmatprep.mubr.f32.mxu0 0.0
      %476 = vmatmul.mubr.f32.gmra.mxu0 %v404
      %v477 = vpop.f32.mrf.mxu0
      %v478 = vadd.f32 %v397, %v477
      %v479 = vpop.f32.mrf.mxu0
      %480 = vdwg.mxu0
      %vm485 = vcmask 1040384
      %v486 = vrot.slane %v473, 7
      %v487 = vrot.slane %v297, 7
      %v488 = vrot.slane %v478, 7
      %v489 = vsel %vm485, %v486, %v488
      %v490 = vrot.slane %v298, 7
      %v491 = vsel %vm485, %v487, %v490
      %v498 = vsel %vm485, 0.0, %v486
      %v499 = vsel %vm485, 0.0, %v487
      %v500 = vsel %vm485, %v488, 0.0
      %v501 = vsel %vm485, %v490, 0.0
      %v502 = vld [vmem:[%s5] sm:$0xff]
      %v503 = vld [vmem:[%s5 + $0x8] sm:$0xff]
      %v504 = vld [vmem:[%s5 + $0x10] sm:$0xff]
      %v505 = vld [vmem:[%s5 + $0x18] sm:$0xff]
      %v506 = vld [vmem:[%s5 + $0x20] sm:$0xff]
      %v507 = vld [vmem:[%s5 + $0x28] sm:$0xff]
      %v508 = vld [vmem:[%s5 + $0x30] sm:$0xff]
      %v509 = vld [vmem:[%s5 + $0x38] sm:$0xff]
      %v510 = vld [vmem:[%s5 + $0x40] sm:$0xff]
      %v511 = vld [vmem:[%s5 + $0x48] sm:$0xff]
      %v512 = vld [vmem:[%s5 + $0x50] sm:$0xff]
      %v513 = vld [vmem:[%s5 + $0x58] sm:$0xff]
      %v514 = vld [vmem:[%s5 + $0x60] sm:$0xff]
      %v515 = vld [vmem:[%s5 + $0x68] sm:$0xff]
      %v516 = vld [vmem:[%s5 + $0x70] sm:$0xff]
      %v517 = vld [vmem:[%s5 + $0x78] sm:$0xff]
      %v518 = vld [vmem:[%s5 + $0x80] sm:$0xff]
      %v519 = vld [vmem:[%s5 + $0x88] sm:$0xff]
      %v520 = vld [vmem:[%s5 + $0x90] sm:$0xff]
      %v521 = vld [vmem:[%s5 + $0x98] sm:$0xff]
      %v522 = vld [vmem:[%s5 + $0xa0] sm:$0xff]
      %v523 = vld [vmem:[%s5 + $0xa8] sm:$0xff]
      %v524 = vld [vmem:[%s5 + $0xb0] sm:$0xff]
      %v525 = vld [vmem:[%s5 + $0xb8] sm:$0xff]
      %v526 = vld [vmem:[%s5 + $0xc0] sm:$0xff]
      %v527 = vld [vmem:[%s5 + $0xc8] sm:$0xff]
      %v528 = vld [vmem:[%s5 + $0xd0] sm:$0xff]
      %v529 = vld [vmem:[%s5 + $0xd8] sm:$0xff]
      %v530 = vld [vmem:[%s5 + $0xe0] sm:$0xff]
      %v531 = vld [vmem:[%s5 + $0xe8] sm:$0xff]
      %v532 = vld [vmem:[%s5 + $0xf0] sm:$0xff]
      %v533 = vld [vmem:[%s5 + $0xf8] sm:$0xff]
      %s534 = scalar_lea.vmem %s5, 256
      %v535 = vld [vmem:[%s534] sm:$0xff]
      %v536 = vld [vmem:[%s534 + $0x8] sm:$0xff]
      %v537 = vld [vmem:[%s534 + $0x10] sm:$0xff]
      %v538 = vld [vmem:[%s534 + $0x18] sm:$0xff]
      %v539 = vld [vmem:[%s534 + $0x20] sm:$0xff]
      %v540 = vld [vmem:[%s534 + $0x28] sm:$0xff]
      %v541 = vld [vmem:[%s534 + $0x30] sm:$0xff]
      %v542 = vld [vmem:[%s534 + $0x38] sm:$0xff]
      %v543 = vld [vmem:[%s534 + $0x40] sm:$0xff]
      %v544 = vld [vmem:[%s534 + $0x48] sm:$0xff]
      %v545 = vld [vmem:[%s534 + $0x50] sm:$0xff]
      %v546 = vld [vmem:[%s534 + $0x58] sm:$0xff]
      %v547 = vld [vmem:[%s534 + $0x60] sm:$0xff]
      %v548 = vld [vmem:[%s534 + $0x68] sm:$0xff]
      %v549 = vld [vmem:[%s534 + $0x70] sm:$0xff]
      %v550 = vld [vmem:[%s534 + $0x78] sm:$0xff]
      %v551 = vld [vmem:[%s534 + $0x80] sm:$0xff]
      %v552 = vld [vmem:[%s534 + $0x88] sm:$0xff]
      %v553 = vld [vmem:[%s534 + $0x90] sm:$0xff]
      %v554 = vld [vmem:[%s534 + $0x98] sm:$0xff]
      %v555 = vld [vmem:[%s534 + $0xa0] sm:$0xff]
      %v556 = vld [vmem:[%s534 + $0xa8] sm:$0xff]
      %v557 = vld [vmem:[%s534 + $0xb0] sm:$0xff]
      %v558 = vld [vmem:[%s534 + $0xb8] sm:$0xff]
      %v559 = vld [vmem:[%s534 + $0xc0] sm:$0xff]
      %v560 = vld [vmem:[%s534 + $0xc8] sm:$0xff]
      %v561 = vld [vmem:[%s534 + $0xd0] sm:$0xff]
      %v562 = vld [vmem:[%s534 + $0xd8] sm:$0xff]
      %v563 = vld [vmem:[%s534 + $0xe0] sm:$0xff]
      %v564 = vld [vmem:[%s534 + $0xe8] sm:$0xff]
      %v565 = vld [vmem:[%s534 + $0xf0] sm:$0xff]
      %v566 = vld [vmem:[%s534 + $0xf8] sm:$0xff]
      %vm571 = vcmask 1046528
      %v572 = vrot.slane %v498, 1
      %v573 = vrot.slane %v489, 1
      %v574 = vsel %vm571, %v572, %v573
      %v575 = vrot.slane %v499, 1
      %v576 = vrot.slane %v491, 1
      %v577 = vsel %vm571, %v575, %v576
      %v578 = vrot.slane %v500, 1
      %v579 = vsel %vm571, %v573, %v578
      %v580 = vrot.slane %v501, 1
      %v581 = vsel %vm571, %v576, %v580
      %586 = vmatprep.subr.mxu0 0.0
      %587 = vmatpush1.msra.mxu0 %v550
      %588 = vmatprep.subr.mxu0 0.0
      %589 = vmatpush1.msra.mxu0 %v549
      %590 = vmatprep.subr.mxu0 0.0
      %591 = vmatpush1.msra.mxu0 %v548
      %592 = vmatprep.subr.mxu0 0.0
      %593 = vmatpush1.msra.mxu0 %v547
      %594 = vmatprep.subr.mxu0 0.0
      %595 = vmatpush1.msra.mxu0 %v546
      %596 = vmatprep.subr.mxu0 0.0
      %597 = vmatpush1.msra.mxu0 %v545
      %598 = vmatprep.subr.mxu0 0.0
      %599 = vmatpush1.msra.mxu0 %v544
      %600 = vmatprep.subr.mxu0 0.0
      %601 = vmatpush1.msra.mxu0 %v543
      %602 = vmatprep.subr.mxu0 0.0
      %603 = vmatpush1.msra.mxu0 %v542
      %604 = vmatprep.subr.mxu0 0.0
      %605 = vmatpush1.msra.mxu0 %v541
      %606 = vmatprep.subr.mxu0 0.0
      %607 = vmatpush1.msra.mxu0 %v540
      %608 = vmatprep.subr.mxu0 0.0
      %609 = vmatpush1.msra.mxu0 %v539
      %610 = vmatprep.subr.mxu0 0.0
      %611 = vmatpush1.msra.mxu0 %v538
      %612 = vmatprep.subr.mxu0 0.0
      %613 = vmatpush1.msra.mxu0 %v537
      %614 = vmatprep.subr.mxu0 0.0
      %615 = vmatpush1.msra.mxu0 %v536
      %616 = vmatprep.subr.mxu0 0.0
      %617 = vmatpush1.msra.mxu0 %v535
      %618 = vmatprep.subr.mxu0 0.0
      %619 = vmatpush2.msra.mxu0 %v566
      %620 = vmatprep.subr.mxu0 0.0
      %621 = vmatpush2.msra.mxu0 %v565
      %622 = vmatprep.subr.mxu0 0.0
      %623 = vmatpush2.msra.mxu0 %v564
      %624 = vmatprep.subr.mxu0 0.0
      %625 = vmatpush2.msra.mxu0 %v563
      %626 = vmatprep.subr.mxu0 0.0
      %627 = vmatpush2.msra.mxu0 %v562
      %628 = vmatprep.subr.mxu0 0.0
      %629 = vmatpush2.msra.mxu0 %v561
      %630 = vmatprep.subr.mxu0 0.0
      %631 = vmatpush2.msra.mxu0 %v560
      %632 = vmatprep.subr.mxu0 0.0
      %633 = vmatpush2.msra.mxu0 %v559
      %634 = vmatprep.subr.mxu0 0.0
      %635 = vmatpush2.msra.mxu0 %v558
      %636 = vmatprep.subr.mxu0 0.0
      %637 = vmatpush2.msra.mxu0 %v557
      %638 = vmatprep.subr.mxu0 0.0
      %639 = vmatpush2.msra.mxu0 %v556
      %640 = vmatprep.subr.mxu0 0.0
      %641 = vmatpush2.msra.mxu0 %v555
      %642 = vmatprep.subr.mxu0 0.0
      %643 = vmatpush2.msra.mxu0 %v554
      %644 = vmatprep.subr.mxu0 0.0
      %645 = vmatpush2.msra.mxu0 %v553
      %646 = vmatprep.subr.mxu0 0.0
      %647 = vmatpush2.msra.mxu0 %v552
      %648 = vmatprep.subr.mxu0 0.0
      %649 = vmatpush2.msra.mxu0 %v551
      %650 = vmatprep.mubr.f32.mxu0 %v577
      %651 = vmatmul.mubr.f32.gmra.mxu0 %v574
      %v652 = vpop.f32.mrf.mxu0
      %v653 = vadd.f32 0.0, %v652
      %v654 = vpop.f32.mrf.mxu0
      %655 = vmatprep.mubr.f32.mxu0 %v581
      %656 = vmatmul.mubr.f32.gmra.mxu0 %v579
      %v657 = vpop.f32.mrf.mxu0
      %v658 = vadd.f32 0.0, %v657
      %v659 = vpop.f32.mrf.mxu0
      %660 = vdwg.mxu0
      %661 = vmatprep.subr.mxu0 0.0
      %662 = vmatpush1.msra.mxu0 %v517
      %663 = vmatprep.subr.mxu0 0.0
      %664 = vmatpush1.msra.mxu0 %v516
      %665 = vmatprep.subr.mxu0 0.0
      %666 = vmatpush1.msra.mxu0 %v515
      %667 = vmatprep.subr.mxu0 0.0
      %668 = vmatpush1.msra.mxu0 %v514
      %669 = vmatprep.subr.mxu0 0.0
      %670 = vmatpush1.msra.mxu0 %v513
      %671 = vmatprep.subr.mxu0 0.0
      %672 = vmatpush1.msra.mxu0 %v512
      %673 = vmatprep.subr.mxu0 0.0
      %674 = vmatpush1.msra.mxu0 %v511
      %675 = vmatprep.subr.mxu0 0.0
      %676 = vmatpush1.msra.mxu0 %v510
      %677 = vmatprep.subr.mxu0 0.0
      %678 = vmatpush1.msra.mxu0 %v509
      %679 = vmatprep.subr.mxu0 0.0
      %680 = vmatpush1.msra.mxu0 %v508
      %681 = vmatprep.subr.mxu0 0.0
      %682 = vmatpush1.msra.mxu0 %v507
      %683 = vmatprep.subr.mxu0 0.0
      %684 = vmatpush1.msra.mxu0 %v506
      %685 = vmatprep.subr.mxu0 0.0
      %686 = vmatpush1.msra.mxu0 %v505
      %687 = vmatprep.subr.mxu0 0.0
      %688 = vmatpush1.msra.mxu0 %v504
      %689 = vmatprep.subr.mxu0 0.0
      %690 = vmatpush1.msra.mxu0 %v503
      %691 = vmatprep.subr.mxu0 0.0
      %692 = vmatpush1.msra.mxu0 %v502
      %693 = vmatprep.subr.mxu0 0.0
      %694 = vmatpush2.msra.mxu0 %v533
      %695 = vmatprep.subr.mxu0 0.0
      %696 = vmatpush2.msra.mxu0 %v532
      %697 = vmatprep.subr.mxu0 0.0
      %698 = vmatpush2.msra.mxu0 %v531
      %699 = vmatprep.subr.mxu0 0.0
      %700 = vmatpush2.msra.mxu0 %v530
      %701 = vmatprep.subr.mxu0 0.0
      %702 = vmatpush2.msra.mxu0 %v529
      %703 = vmatprep.subr.mxu0 0.0
      %704 = vmatpush2.msra.mxu0 %v528
      %705 = vmatprep.subr.mxu0 0.0
      %706 = vmatpush2.msra.mxu0 %v527
      %707 = vmatprep.subr.mxu0 0.0
      %708 = vmatpush2.msra.mxu0 %v526
      %709 = vmatprep.subr.mxu0 0.0
      %710 = vmatpush2.msra.mxu0 %v525
      %711 = vmatprep.subr.mxu0 0.0
      %712 = vmatpush2.msra.mxu0 %v524
      %713 = vmatprep.subr.mxu0 0.0
      %714 = vmatpush2.msra.mxu0 %v523
      %715 = vmatprep.subr.mxu0 0.0
      %716 = vmatpush2.msra.mxu0 %v522
      %717 = vmatprep.subr.mxu0 0.0
      %718 = vmatpush2.msra.mxu0 %v521
      %719 = vmatprep.subr.mxu0 0.0
      %720 = vmatpush2.msra.mxu0 %v520
      %721 = vmatprep.subr.mxu0 0.0
      %722 = vmatpush2.msra.mxu0 %v519
      %723 = vmatprep.subr.mxu0 0.0
      %724 = vmatpush2.msra.mxu0 %v518
      %725 = vmatprep.mubr.f32.mxu0 %v499
      %726 = vmatmul.mubr.f32.gmra.mxu0 %v498
      %v727 = vpop.f32.mrf.mxu0
      %v728 = vadd.f32 %v653, %v727
      %v729 = vpop.f32.mrf.mxu0
      %730 = vmatprep.mubr.f32.mxu0 %v491
      %731 = vmatmul.mubr.f32.gmra.mxu0 %v489
      %v732 = vpop.f32.mrf.mxu0
      %v733 = vadd.f32 %v658, %v732
      %v734 = vpop.f32.mrf.mxu0
      %735 = vdwg.mxu0
      %s736 = scalar_lea.vmem %s5, 512
      %v737 = vld [vmem:[%s736] sm:$0xff]
      %v738 = vld [vmem:[%s736 + $0x8] sm:$0xff]
      %v739 = vld [vmem:[%s736 + $0x10] sm:$0xff]
      %v740 = vld [vmem:[%s736 + $0x18] sm:$0xff]
      %v741 = vld [vmem:[%s736 + $0x20] sm:$0xff]
      %v742 = vld [vmem:[%s736 + $0x28] sm:$0xff]
      %v743 = vld [vmem:[%s736 + $0x30] sm:$0xff]
      %v744 = vld [vmem:[%s736 + $0x38] sm:$0xff]
      %v745 = vld [vmem:[%s736 + $0x40] sm:$0xff]
      %v746 = vld [vmem:[%s736 + $0x48] sm:$0xff]
      %v747 = vld [vmem:[%s736 + $0x50] sm:$0xff]
      %v748 = vld [vmem:[%s736 + $0x58] sm:$0xff]
      %v749 = vld [vmem:[%s736 + $0x60] sm:$0xff]
      %v750 = vld [vmem:[%s736 + $0x68] sm:$0xff]
      %v751 = vld [vmem:[%s736 + $0x70] sm:$0xff]
      %v752 = vld [vmem:[%s736 + $0x78] sm:$0xff]
      %v753 = vld [vmem:[%s736 + $0x80] sm:$0xff]
      %v754 = vld [vmem:[%s736 + $0x88] sm:$0xff]
      %v755 = vld [vmem:[%s736 + $0x90] sm:$0xff]
      %v756 = vld [vmem:[%s736 + $0x98] sm:$0xff]
      %v757 = vld [vmem:[%s736 + $0xa0] sm:$0xff]
      %v758 = vld [vmem:[%s736 + $0xa8] sm:$0xff]
      %v759 = vld [vmem:[%s736 + $0xb0] sm:$0xff]
      %v760 = vld [vmem:[%s736 + $0xb8] sm:$0xff]
      %v761 = vld [vmem:[%s736 + $0xc0] sm:$0xff]
      %v762 = vld [vmem:[%s736 + $0xc8] sm:$0xff]
      %v763 = vld [vmem:[%s736 + $0xd0] sm:$0xff]
      %v764 = vld [vmem:[%s736 + $0xd8] sm:$0xff]
      %v765 = vld [vmem:[%s736 + $0xe0] sm:$0xff]
      %v766 = vld [vmem:[%s736 + $0xe8] sm:$0xff]
      %v767 = vld [vmem:[%s736 + $0xf0] sm:$0xff]
      %v768 = vld [vmem:[%s736 + $0xf8] sm:$0xff]
      %vm769 = vcmask 1045504
      %v770 = vrot.slane %v498, 2
      %v771 = vrot.slane %v489, 2
      %v772 = vsel %vm769, %v770, %v771
      %v773 = vrot.slane %v499, 2
      %v774 = vrot.slane %v491, 2
      %v775 = vsel %vm769, %v773, %v774
      %v776 = vrot.slane %v500, 2
      %v777 = vsel %vm769, %v771, %v776
      %v778 = vrot.slane %v501, 2
      %v779 = vsel %vm769, %v774, %v778
      %784 = vmatprep.subr.mxu0 0.0
      %785 = vmatpush1.msra.mxu0 %v752
      %786 = vmatprep.subr.mxu0 0.0
      %787 = vmatpush1.msra.mxu0 %v751
      %788 = vmatprep.subr.mxu0 0.0
      %789 = vmatpush1.msra.mxu0 %v750
      %790 = vmatprep.subr.mxu0 0.0
      %791 = vmatpush1.msra.mxu0 %v749
      %792 = vmatprep.subr.mxu0 0.0
      %793 = vmatpush1.msra.mxu0 %v748
      %794 = vmatprep.subr.mxu0 0.0
      %795 = vmatpush1.msra.mxu0 %v747
      %796 = vmatprep.subr.mxu0 0.0
      %797 = vmatpush1.msra.mxu0 %v746
      %798 = vmatprep.subr.mxu0 0.0
      %799 = vmatpush1.msra.mxu0 %v745
      %800 = vmatprep.subr.mxu0 0.0
      %801 = vmatpush1.msra.mxu0 %v744
      %802 = vmatprep.subr.mxu0 0.0
      %803 = vmatpush1.msra.mxu0 %v743
      %804 = vmatprep.subr.mxu0 0.0
      %805 = vmatpush1.msra.mxu0 %v742
      %806 = vmatprep.subr.mxu0 0.0
      %807 = vmatpush1.msra.mxu0 %v741
      %808 = vmatprep.subr.mxu0 0.0
      %809 = vmatpush1.msra.mxu0 %v740
      %810 = vmatprep.subr.mxu0 0.0
      %811 = vmatpush1.msra.mxu0 %v739
      %812 = vmatprep.subr.mxu0 0.0
      %813 = vmatpush1.msra.mxu0 %v738
      %814 = vmatprep.subr.mxu0 0.0
      %815 = vmatpush1.msra.mxu0 %v737
      %816 = vmatprep.subr.mxu0 0.0
      %817 = vmatpush2.msra.mxu0 %v768
      %818 = vmatprep.subr.mxu0 0.0
      %819 = vmatpush2.msra.mxu0 %v767
      %820 = vmatprep.subr.mxu0 0.0
      %821 = vmatpush2.msra.mxu0 %v766
      %822 = vmatprep.subr.mxu0 0.0
      %823 = vmatpush2.msra.mxu0 %v765
      %824 = vmatprep.subr.mxu0 0.0
      %825 = vmatpush2.msra.mxu0 %v764
      %826 = vmatprep.subr.mxu0 0.0
      %827 = vmatpush2.msra.mxu0 %v763
      %828 = vmatprep.subr.mxu0 0.0
      %829 = vmatpush2.msra.mxu0 %v762
      %830 = vmatprep.subr.mxu0 0.0
      %831 = vmatpush2.msra.mxu0 %v761
      %832 = vmatprep.subr.mxu0 0.0
      %833 = vmatpush2.msra.mxu0 %v760
      %834 = vmatprep.subr.mxu0 0.0
      %835 = vmatpush2.msra.mxu0 %v759
      %836 = vmatprep.subr.mxu0 0.0
      %837 = vmatpush2.msra.mxu0 %v758
      %838 = vmatprep.subr.mxu0 0.0
      %839 = vmatpush2.msra.mxu0 %v757
      %840 = vmatprep.subr.mxu0 0.0
      %841 = vmatpush2.msra.mxu0 %v756
      %842 = vmatprep.subr.mxu0 0.0
      %843 = vmatpush2.msra.mxu0 %v755
      %844 = vmatprep.subr.mxu0 0.0
      %845 = vmatpush2.msra.mxu0 %v754
      %846 = vmatprep.subr.mxu0 0.0
      %847 = vmatpush2.msra.mxu0 %v753
      %848 = vmatprep.mubr.f32.mxu0 %v775
      %849 = vmatmul.mubr.f32.gmra.mxu0 %v772
      %v850 = vpop.f32.mrf.mxu0
      %v851 = vadd.f32 0.0, %v850
      %v852 = vpop.f32.mrf.mxu0
      %853 = vmatprep.mubr.f32.mxu0 %v779
      %854 = vmatmul.mubr.f32.gmra.mxu0 %v777
      %v855 = vpop.f32.mrf.mxu0
      %v856 = vadd.f32 0.0, %v855
      %v857 = vpop.f32.mrf.mxu0
      %858 = vdwg.mxu0
      %v859 = vadd.f32 %v728, %v851
      %v860 = vadd.f32 %v733, %v856
      %v861 = vld [vmem:[%s6] sm:$0x1]
      %v863 = vlaneseq
      %v864 = vshrl.u32 %v863, 7
      %v865 = vsub.s32 0, %v864
      %v866 = vrot.slane %v861, %v865
      %v868 = vadd.f32 %v859, %v866
      %v869 = vadd.f32 %v860, %v866
      %v870 = vadd.f32 %v868, %v869
      %v871 = vrot.slane %v870, 4
      %v872 = vadd.f32 %v870, %v871
      %v873 = vrot.slane %v872, 2
      %v874 = vadd.f32 %v872, %v873
      %v875 = vrot.slane %v874, 1
      %v876 = vadd.f32 %v874, %v875
      %877 = vrot.lane.b32.xlu0 %v876, 8
      %v878 = vpop.permute.xlu0 %877
      %v879 = vadd.f32 %v876, %v878
      %880 = vrot.lane.b32.xlu0 %v879, 16
      %v881 = vpop.permute.xlu0 %880
      %v882 = vadd.f32 %v879, %v881
      %883 = vrot.lane.b32.xlu0 %v882, 32
      %v884 = vpop.permute.xlu0 %883
      %v885 = vadd.f32 %v882, %v884
      %886 = vrot.lane.b32.xlu0 %v885, 64
      %v887 = vpop.permute.xlu0 %886
      %v888 = vadd.f32 %v885, %v887
      %v889 = vmul.f32 %v888, 0.00390625
      %v890 = vlaneseq
      %v891 = vshrl.u32 %v890, 7
      %v892 = vsub.s32 0, %v891
      %v893 = vrot.slane %v889, %v892
      %v894 = vsub.f32 %v868, %v893
      %v895 = vsub.f32 %v869, %v893
      %v896 = vmul.f32 %v894, %v894
      %v897 = vmul.f32 %v895, %v895
      %v898 = vadd.f32 %v896, %v897
      %v899 = vrot.slane %v898, 4
      %v900 = vadd.f32 %v898, %v899
      %v901 = vrot.slane %v900, 2
      %v902 = vadd.f32 %v900, %v901
      %v903 = vrot.slane %v902, 1
      %v904 = vadd.f32 %v902, %v903
      %905 = vrot.lane.b32.xlu0 %v904, 8
      %v906 = vpop.permute.xlu0 %905
      %v907 = vadd.f32 %v904, %v906
      %908 = vrot.lane.b32.xlu0 %v907, 16
      %v909 = vpop.permute.xlu0 %908
      %v910 = vadd.f32 %v907, %v909
      %911 = vrot.lane.b32.xlu0 %v910, 32
      %v912 = vpop.permute.xlu0 %911
      %v913 = vadd.f32 %v910, %v912
      %914 = vrot.lane.b32.xlu0 %v913, 64
      %v915 = vpop.permute.xlu0 %914
      %v916 = vadd.f32 %v913, %v915
      %v917 = vmul.f32 %v916, 0.00390625
      %v918 = vadd.f32 %v917, 1e-05
      %v919 = vrsqrt.pop %v918
      %v920 = vlaneseq
      %v921 = vshrl.u32 %v920, 7
      %v922 = vsub.s32 0, %v921
      %v923 = vrot.slane %v919, %v922
      %v924 = vmul.f32 %v894, %v923
      %v925 = vmul.f32 %v895, %v923
      %v926 = vmul.f32 %v924, 0.5
      %v927 = vmul.f32 %v925, 0.5
      %v928 = vmul.f32 %v924, 0.70710677
      %v929 = vmul.f32 %v925, 0.70710677
      %v930 = verf.f32.pop %v928
      %v931 = verf.f32.pop %v929
      %v932 = vadd.f32 %v930, 1.0
      %v933 = vadd.f32 %v931, 1.0
      %v934 = vmul.f32 %v926, %v932
      %v935 = vmul.f32 %v927, %v933
      %936 = vst [vmem:[%s295] sm:$0xff] %v934
      %937 = vst [vmem:[%s295 + $0x8] sm:$0xff] %v935
      %p938 = scmp.lt.s32.totalorder %s18, 1
      %s939 = scalar_select %p938, %s18, 1
      %s940 = smul.addr %s939, 2
      %s941 = smul.addr %s940, 8
      %s942 = scalar_lea.vmem %s7, %s941
      // Predicated region
      $region49: #{apply.1} parent=47 // pred_check
        %p943 = pneg %p193
      $region50: #{apply.1} parent=47 // pred_check_branch
        %945 = sbr.rel (%p943) target = $region52
      $region51: #{apply.1} parent=47 // pred_region
        _
      $region52: #{apply.1} parent=47 // pred_fallthru
        _
    $region48: #{apply.1} parent=5 // pred_fallthru
      _
    %p946 = scmp.le.s32.totalorder 2, %s13
    // Predicated region
    $region53: #{apply.1} parent=5 // pred_check
      %p947 = pneg %p946
    $region54: #{apply.1} parent=5 // pred_check_branch
      %949 = sbr.rel (%p947) target = $region56
    $region55: #{apply.1} parent=5 // pred_region
      %s950 = ssub.s32 %s13, 2
      // Predicated region
      $region57: #{apply.1} parent=55 // pred_check
        %p951 = pneg %p199
      $region58: #{apply.1} parent=55 // pred_check_branch
        %953 = sbr.rel (%p951) target = $region60
      $region59: #{apply.1} parent=55 // pred_region
        %p954 = scmp.lt.s32.totalorder %s19, 1
        %s955 = scalar_select %p954, %s19, 1
        %s956 = smul.addr %s955, 2
        %s957 = smul.addr %s956, 8
        %s958 = scalar_lea.vmem %s7, %s957
      $region60: #{apply.1} parent=55 // pred_fallthru
        _
    $region56: #{apply.1} parent=5 // pred_fallthru
      _
  $region6: #{apply.1} parent=0 // loop_footer
    %s17 = sadd.s32 1, %s13
  $region7: #{apply.1} parent=0 // loop_footer_branch
    %12 = sbr.rel target = $region3
  $region8: #{apply.1} parent=0 // loop_exit
    _

</llo_original>
